<compile_context>
chip_gen: v6e
topology: v6e:2x2x1
jax: 0.10.0
libtpu: 0.0.40
codegen_flags: <defaults>
</compile_context>

<pallas_src>
import functools

import jax
import jax.numpy as jnp
import numpy as np
from jax.experimental import pallas as pl
from jax.experimental.pallas import tpu as pltpu

EPS = 1e-5     # torch.nn.LayerNorm default
LANE = 128
SUBLANE = 8


def _round_up(x, m):
    return ((x + m - 1) // m) * m


def _layernorm_f32(h, gamma, beta, n_true):
    """LayerNorm over the last axis in f32.  The last axis may be zero-padded past
    n_true features; the centered sum-of-squares is corrected exactly for those
    all-zero lanes, and gamma/beta are zero there, so padded lanes stay exactly 0."""
    n_pad = h.shape[-1] - n_true
    mu = jnp.sum(h, axis=-1, keepdims=True) * (1.0 / n_true)
    c = h - mu
    ss = jnp.sum(c * c, axis=-1, keepdims=True) - float(n_pad) * (mu * mu)
    var = jnp.maximum(ss * (1.0 / n_true), 0.0)   # clamp: keeps padded batch rows safe
    return c * jax.lax.rsqrt(var + EPS) * gamma + beta


def _critic_kernel(state_ref, action_ref, w1_ref, w2a_ref, w2b_ref,
                   prows_ref, b3_ref, out_ref, *, n0, n1, h0p, h1p):
    prows = prows_ref[...]                                     # (8, Hmax) f32
    b1, g1, be1 = prows[0:1, :h0p], prows[1:2, :h0p], prows[2:3, :h0p]
    b2, g2, be2 = prows[3:4, :h1p], prows[4:5, :h1p], prows[5:6, :h1p]

    # ---- state branch: Linear -> ReLU -> LayerNorm (bf16 MXU operands, f32 accumulate)
    s = state_ref[...].astype(jnp.bfloat16)
    h1 = jnp.dot(s, w1_ref[...], preferred_element_type=jnp.float32) + b1
    h1 = jnp.maximum(h1, 0.0)
    h1n = _layernorm_f32(h1, g1, be1, n0)

    # ---- q layer 1: Linear(cat([h1n, action])) -> ReLU -> LayerNorm
    #      (concat folded into a split W2: cat([f, a]) @ W2 == f @ W2a + a @ W2b)
    a = action_ref[...].astype(jnp.bfloat16)
    h2 = (jnp.dot(h1n.astype(jnp.bfloat16), w2a_ref[...],
                  preferred_element_type=jnp.float32)
          + jnp.dot(a, w2b_ref[...], preferred_element_type=jnp.float32)
          + b2)
    h2 = jnp.maximum(h2, 0.0)
    h2n = _layernorm_f32(h2, g2, be2, n1)

    # ---- final Linear(H1 -> 1), produced lane-dense:
    #      params(8, H1p) @ h2n(tile_b, H1p)^T -> (8, tile_b); row 6 holds w3 . h2n[b].
    #      Batch ends up on the lane axis, so the store is an unmasked (1, tile_b) row.
    qk = jax.lax.dot_general(
        prows[:, :h1p].astype(jnp.bfloat16), h2n.astype(jnp.bfloat16),
        dimension_numbers=(((1,), (1,)), ((), ())),
        preferred_element_type=jnp.float32)                    # (8, tile_b)
    out_ref[...] = qk[6:7, :] + b3_ref[0]


def _choose_tile_b(batch, s_dim, a_dim, h0p, h1p):
    """One sublane-aligned block for small batches; otherwise big lane-aligned
    (multiple-of-128) tiles capped by a VMEM budget, split into >= 2 grid steps so
    the 'parallel' axis can shard across v7x's two TensorCores."""
    if batch <= 128:
        return max(SUBLANE, _round_up(batch, SUBLANE))
    # rough f32 bytes per batch row: double-buffered I/O + fused intermediates
    per_row = 4 * (2 * (s_dim + a_dim + 1) + 3 * (h0p + h1p))
    budget = 20 * 1024 * 1024
    cap_chunks = max(1, min(16, (budget // per_row) // LANE))  # tile_b <= 2048 rows
    chunks = -(-batch // LANE)
    n_steps = max(2, -(-chunks // cap_chunks))
    return LANE * (-(-chunks // n_steps))


def critic_forward(kp, state, action, *, tile_b=None):
    """Fused DDPG-critic forward.  `kp` comes from prepare_kernel_params()."""
    B, S = state.shape
    _, A = action.shape
    H0p = kp["w1"].shape[1]
    H1p = kp["w2a"].shape[1]
    Hmax = kp["prows"].shape[1]

    if tile_b is None:
        tile_b = _choose_tile_b(B, S, A, H0p, H1p)
    n_tiles = -(-B // tile_b)
    Bp = n_tiles * tile_b

    st, ac = state, action
    if Bp != B:   # pad only when the grid would overrun; padded rows are sliced off below
        st = jnp.pad(st, ((0, Bp - B), (0, 0)))
        ac = jnp.pad(ac, ((0, Bp - B), (0, 0)))

    full = lambda shape: pl.BlockSpec(shape, lambda i: (0, 0))
    in_specs = [
        pl.BlockSpec((tile_b, S), lambda i: (i, 0)),        # state   (batch-tiled, f32)
        pl.BlockSpec((tile_b, A), lambda i: (i, 0)),        # action  (batch-tiled, f32)
        full((S, H0p)),                                     # w1   (bf16)
        full((H0p, H1p)),                                   # w2a  (bf16)
        full((A, H1p)),                                     # w2b  (bf16)
        full((8, Hmax)),                                    # b1,g1,be1,b2,g2,be2,w3 (f32)
        pl.BlockSpec(memory_space=pltpu.MemorySpace.SMEM),  # b3 scalar bias
    ]
    out_spec = pl.BlockSpec((1, tile_b), lambda i: (0, i))  # lane-dense q row per step

    args = (st, ac, kp["w1"], kp["w2a"], kp["w2b"], kp["prows"], kp["b3"])

    flops = 2 * Bp * (S * H0p + (H0p + A) * H1p + 8 * H1p) + 12 * Bp * (H0p + H1p)
    bytes_accessed = sum(int(np.prod(a.shape)) * a.dtype.itemsize for a in args) + Bp * 4
    cost = pl.CostEstimate(flops=int(flops), transcendentals=int(2 * Bp),
                           bytes_accessed=int(bytes_accessed))

    out = pl.pallas_call(
        functools.partial(_critic_kernel, n0=kp["n0"], n1=kp["n1"], h0p=H0p, h1p=H1p),
        out_shape=jax.ShapeDtypeStruct((1, Bp), jnp.float32),
        grid=(n_tiles,),
        in_specs=in_specs,
        out_specs=out_spec,
        compiler_params=pltpu.CompilerParams(
            dimension_semantics=("parallel",),
            # v5e's scoped-VMEM default is only 16 MiB; 40 MiB fits every generation
            # (v7x physical VMEM is 64 MiB) and covers the largest tile we pick.
            vmem_limit_bytes=40 * 1024 * 1024,
        ),
        cost_estimate=cost,
    )(*args)
    return out.reshape(Bp, 1)[:B]


def init_params(key, state_dim, action_dim, hidden_dims=(400, 300)):
    """f32 parameters with the PyTorch nn.Linear / nn.LayerNorm shapes and init."""
    h0, h1 = hidden_dims
    ks = jax.random.split(key, 6)

    def unif(k, shape, fan_in):
        bound = 1.0 / np.sqrt(fan_in)
        return jax.random.uniform(k, shape, jnp.float32, -bound, bound)

    return dict(
        w1=unif(ks[0], (state_dim, h0), state_dim),
        b1=unif(ks[1], (h0,), state_dim),
        g1=jnp.ones((h0,), jnp.float32), be1=jnp.zeros((h0,), jnp.float32),
        w2=unif(ks[2], (h0 + action_dim, h1), h0 + action_dim),
        b2=unif(ks[3], (h1,), h0 + action_dim),
        g2=jnp.ones((h1,), jnp.float32), be2=jnp.zeros((h1,), jnp.float32),
        w3=unif(ks[4], (h1,), h1),
        b3=unif(ks[5], (1,), h1),
    )


def prepare_kernel_params(raw):
    """Kernel-side parameter layout: hidden dims zero-padded to multiples of 128
    (true sizes kept for the LayerNorm divisors), matmul weights in bf16, and the
    seven small per-feature rows coalesced into one (8, Hmax) f32 block."""
    h0 = raw["w1"].shape[1]
    h1 = raw["w2"].shape[1]
    h0p, h1p = _round_up(h0, LANE), _round_up(h1, LANE)
    hmax = max(h0p, h1p)

    w1 = jnp.pad(raw["w1"], ((0, 0), (0, h0p - h0))).astype(jnp.bfloat16)
    w2a = jnp.pad(raw["w2"][:h0], ((0, h0p - h0), (0, h1p - h1))).astype(jnp.bfloat16)
    w2b = jnp.pad(raw["w2"][h0:], ((0, 0), (0, h1p - h1))).astype(jnp.bfloat16)

    rows = np.zeros((8, hmax), np.float32)
    rows[0, :h0] = np.asarray(raw["b1"]);  rows[1, :h0] = np.asarray(raw["g1"])
    rows[2, :h0] = np.asarray(raw["be1"]); rows[3, :h1] = np.asarray(raw["b2"])
    rows[4, :h1] = np.asarray(raw["g2"]);  rows[5, :h1] = np.asarray(raw["be2"])
    rows[6, :h1] = np.asarray(raw["w3"])   # row 7 stays zero
    return dict(w1=w1, w2a=w2a, w2b=w2b, prows=jnp.asarray(rows),
                b3=raw["b3"], n0=h0, n1=h1)


def reference_forward_mixed(kp, state, action):
    """Pure-JAX mirror of the kernel's exact numerics (bf16 MXU operands, f32
    accumulation, padded hidden dims, true-n LayerNorm) — tight tolerance."""
    h0p = kp["w1"].shape[1]
    h1p = kp["w2a"].shape[1]
    prows = kp["prows"]
    b1, g1, be1 = prows[0, :h0p], prows[1, :h0p], prows[2, :h0p]
    b2, g2, be2 = prows[3, :h1p], prows[4, :h1p], prows[5, :h1p]
    w3 = prows[6, :h1p]

    h1 = jnp.dot(state.astype(jnp.bfloat16), kp["w1"],
                 preferred_element_type=jnp.float32) + b1
    h1n = _layernorm_f32(jnp.maximum(h1, 0.0), g1, be1, kp["n0"])
    h2 = (jnp.dot(h1n.astype(jnp.bfloat16), kp["w2a"],
                  preferred_element_type=jnp.float32)
          + jnp.dot(action.astype(jnp.bfloat16), kp["w2b"],
                    preferred_element_type=jnp.float32)
          + b2)
    h2n = _layernorm_f32(jnp.maximum(h2, 0.0), g2, be2, kp["n1"])
    q = jnp.dot(h2n.astype(jnp.bfloat16), w3.astype(jnp.bfloat16)[:, None],
                preferred_element_type=jnp.float32)
    return q + kp["b3"]


def reference_forward_f32(raw, state, action):
    """Full-f32 PyTorch-style forward (loose tolerance vs the bf16-operand kernel)."""
    def ln(h, g, b):
        mu = jnp.mean(h, -1, keepdims=True)
        var = jnp.mean((h - mu) ** 2, -1, keepdims=True)
        return (h - mu) / jnp.sqrt(var + EPS) * g + b
    hi = jax.lax.Precision.HIGHEST
    h1 = jnp.maximum(jnp.dot(state, raw["w1"], precision=hi) + raw["b1"], 0.0)
    h1n = ln(h1, raw["g1"], raw["be1"])
    comb = jnp.concatenate([h1n, action], axis=1)
    h2 = jnp.maximum(jnp.dot(comb, raw["w2"], precision=hi) + raw["b2"], 0.0)
    h2n = ln(h2, raw["g2"], raw["be2"])
    return jnp.dot(h2n, raw["w3"][:, None], precision=hi) + raw["b3"]


if __name__ == "__main__":
    STATE_DIM, ACTION_DIM = 16, 8
    # Small stand-in for the default [400, 300]; deliberately NOT lane multiples so
    # the hidden-dim padding (-> 128/128) and true-n LayerNorm path is exercised.
    HIDDEN = (120, 96)

    key = jax.random.PRNGKey(0)
    kp_key, data_key = jax.random.split(key)
    raw = init_params(kp_key, STATE_DIM, ACTION_DIM, HIDDEN)
    kparams = prepare_kernel_params(raw)

    # B=8  : one grid step, single sublane-aligned block, no batch padding.
    # B=300: two "parallel" 256-row lane-aligned tiles (batch padded to 512).
    for B in (8, 300):
        ks, ka = jax.random.split(jax.random.fold_in(data_key, B))
        state = jax.random.normal(ks, (B, STATE_DIM), jnp.float32)
        action = jax.random.normal(ka, (B, ACTION_DIM), jnp.float32)

        q = jax.block_until_ready(critic_forward(kparams, state, action))
        assert q.shape == (B, 1)

        # Tight check vs. a reference that mirrors the kernel's mixed precision.
        q_mirror = reference_forward_mixed(kparams, state, action)
        np.testing.assert_allclose(np.asarray(q), np.asarray(q_mirror),
                                   rtol=2e-3, atol=2e-3)
        # Looser check vs. the full-f32 PyTorch-style forward.
        q_f32 = reference_forward_f32(raw, state, action)
        np.testing.assert_allclose(np.asarray(q), np.asarray(q_f32),
                                   rtol=5e-2, atol=5e-2)

    print("KERNEL_OK")
</pallas_src>

<mosaic_0001>
module attributes {stable_mosaic.version = 11 : i64} {
  func.func @_critic_kernel(%arg0: i32, %arg1: memref<8x16xf32, #tpu.memory_space<vmem>>, %arg2: memref<8x8xf32, #tpu.memory_space<vmem>>, %arg3: memref<16x128xbf16, #tpu.memory_space<vmem>>, %arg4: memref<128x128xbf16, #tpu.memory_space<vmem>>, %arg5: memref<8x128xbf16, #tpu.memory_space<vmem>>, %arg6: memref<8x128xf32, #tpu.memory_space<vmem>>, %arg7: memref<1xf32, #tpu.memory_space<smem>>, %arg8: memref<1x8xf32, #tpu.memory_space<vmem>>) attributes {dimension_semantics = [#tpu.dimension_semantics<parallel>], iteration_bounds = array<i64: 1>, scalar_prefetch = 0 : i64, scratch_operands = 0 : i64, tpu.core_type = #tpu.core_type<tc>, window_params = [{transform_indices = @transform_0, window_bounds = array<i64: 8, 16>}, {transform_indices = @transform_1, window_bounds = array<i64: 8, 8>}, {pipeline_mode = #tpu.pipeline_mode<synchronous>, transform_indices = @transform_2, window_bounds = array<i64: 16, 128>}, {pipeline_mode = #tpu.pipeline_mode<synchronous>, transform_indices = @transform_3, window_bounds = array<i64: 128, 128>}, {pipeline_mode = #tpu.pipeline_mode<synchronous>, transform_indices = @transform_4, window_bounds = array<i64: 8, 128>}, {pipeline_mode = #tpu.pipeline_mode<synchronous>, transform_indices = @transform_5, window_bounds = array<i64: 8, 128>}, {transform_indices = @transform_6, window_bounds = array<i64: 1>}, {transform_indices = @transform_7, window_bounds = array<i64: 1, 8>}]} {
    %c0 = arith.constant 0 : index
    %c0_0 = arith.constant 0 : index
    %0 = vector.load %arg6[%c0, %c0_0] : memref<8x128xf32, #tpu.memory_space<vmem>>, vector<8x128xf32>
    %1 = vector.extract_strided_slice %0 {offsets = [0, 0], sizes = [1, 128], strides = [1, 1]} : vector<8x128xf32> to vector<1x128xf32>
    %2 = vector.extract_strided_slice %0 {offsets = [1, 0], sizes = [1, 128], strides = [1, 1]} : vector<8x128xf32> to vector<1x128xf32>
    %3 = vector.extract_strided_slice %0 {offsets = [2, 0], sizes = [1, 128], strides = [1, 1]} : vector<8x128xf32> to vector<1x128xf32>
    %4 = vector.extract_strided_slice %0 {offsets = [3, 0], sizes = [1, 128], strides = [1, 1]} : vector<8x128xf32> to vector<1x128xf32>
    %5 = vector.extract_strided_slice %0 {offsets = [4, 0], sizes = [1, 128], strides = [1, 1]} : vector<8x128xf32> to vector<1x128xf32>
    %6 = vector.extract_strided_slice %0 {offsets = [5, 0], sizes = [1, 128], strides = [1, 1]} : vector<8x128xf32> to vector<1x128xf32>
    %c0_1 = arith.constant 0 : index
    %c0_2 = arith.constant 0 : index
    %7 = vector.load %arg1[%c0_1, %c0_2] : memref<8x16xf32, #tpu.memory_space<vmem>>, vector<8x16xf32>
    %8 = arith.truncf %7 : vector<8x16xf32> to vector<8x16xbf16>
    %c0_3 = arith.constant 0 : index
    %c0_4 = arith.constant 0 : index
    %9 = vector.load %arg3[%c0_3, %c0_4] : memref<16x128xbf16, #tpu.memory_space<vmem>>, vector<16x128xbf16>
    %cst = arith.constant dense<0.000000e+00> : vector<8x128xf32>
    %10 = tpu.matmul %8, %9, %cst {dimension_numbers = #tpu.dot_dimension_numbers<[1], [0], [0], [1], [0, 0, 1, 1], [], []>} : vector<8x16xbf16>, vector<16x128xbf16>, vector<8x128xf32> -> vector<8x128xf32>
    %11 = vector.broadcast %1 : vector<1x128xf32> to vector<8x128xf32>
    %12 = arith.addf %10, %11 : vector<8x128xf32>
    %cst_5 = arith.constant 0.000000e+00 : f32
    %13 = vector.broadcast %cst_5 : f32 to vector<8x128xf32>
    %14 = arith.maximumf %12, %13 : vector<8x128xf32>
    %cst_6 = arith.constant dense<0.000000e+00> : vector<8xf32>
    %15 = vector.multi_reduction <add>, %14, %cst_6 [1] : vector<8x128xf32> to vector<8xf32>
    %16 = vector.shape_cast %15 : vector<8xf32> to vector<8x1xf32>
    %cst_7 = arith.constant 0.00833333377 : f32
    %17 = vector.broadcast %cst_7 : f32 to vector<8x1xf32>
    %18 = arith.mulf %16, %17 : vector<8x1xf32>
    %19 = vector.broadcast %18 : vector<8x1xf32> to vector<8x128xf32>
    %20 = arith.subf %14, %19 : vector<8x128xf32>
    %21 = arith.mulf %20, %20 : vector<8x128xf32>
    %cst_8 = arith.constant dense<0.000000e+00> : vector<8xf32>
    %22 = vector.multi_reduction <add>, %21, %cst_8 [1] : vector<8x128xf32> to vector<8xf32>
    %23 = vector.shape_cast %22 : vector<8xf32> to vector<8x1xf32>
    %24 = arith.mulf %18, %18 : vector<8x1xf32>
    %cst_9 = arith.constant 8.000000e+00 : f32
    %25 = vector.broadcast %cst_9 : f32 to vector<8x1xf32>
    %26 = arith.mulf %25, %24 : vector<8x1xf32>
    %27 = arith.subf %23, %26 : vector<8x1xf32>
    %cst_10 = arith.constant 0.00833333377 : f32
    %28 = vector.broadcast %cst_10 : f32 to vector<8x1xf32>
    %29 = arith.mulf %27, %28 : vector<8x1xf32>
    %cst_11 = arith.constant 0.000000e+00 : f32
    %30 = vector.broadcast %cst_11 : f32 to vector<8x1xf32>
    %31 = arith.maximumf %29, %30 : vector<8x1xf32>
    %cst_12 = arith.constant 9.99999974E-6 : f32
    %32 = vector.broadcast %cst_12 : f32 to vector<8x1xf32>
    %33 = arith.addf %31, %32 : vector<8x1xf32>
    %34 = math.rsqrt %33 : vector<8x1xf32>
    %35 = vector.broadcast %34 : vector<8x1xf32> to vector<8x128xf32>
    %36 = arith.mulf %20, %35 : vector<8x128xf32>
    %37 = vector.broadcast %2 : vector<1x128xf32> to vector<8x128xf32>
    %38 = arith.mulf %36, %37 : vector<8x128xf32>
    %39 = vector.broadcast %3 : vector<1x128xf32> to vector<8x128xf32>
    %40 = arith.addf %38, %39 : vector<8x128xf32>
    %c0_13 = arith.constant 0 : index
    %c0_14 = arith.constant 0 : index
    %41 = vector.load %arg2[%c0_13, %c0_14] : memref<8x8xf32, #tpu.memory_space<vmem>>, vector<8x8xf32>
    %42 = arith.truncf %41 : vector<8x8xf32> to vector<8x8xbf16>
    %43 = arith.truncf %40 : vector<8x128xf32> to vector<8x128xbf16>
    %c0_15 = arith.constant 0 : index
    %c0_16 = arith.constant 0 : index
    %44 = vector.load %arg4[%c0_15, %c0_16] : memref<128x128xbf16, #tpu.memory_space<vmem>>, vector<128x128xbf16>
    %cst_17 = arith.constant dense<0.000000e+00> : vector<8x128xf32>
    %45 = tpu.matmul %43, %44, %cst_17 {dimension_numbers = #tpu.dot_dimension_numbers<[1], [0], [0], [1], [0, 0, 1, 1], [], []>} : vector<8x128xbf16>, vector<128x128xbf16>, vector<8x128xf32> -> vector<8x128xf32>
    %c0_18 = arith.constant 0 : index
    %c0_19 = arith.constant 0 : index
    %46 = vector.load %arg5[%c0_18, %c0_19] : memref<8x128xbf16, #tpu.memory_space<vmem>>, vector<8x128xbf16>
    %cst_20 = arith.constant dense<0.000000e+00> : vector<8x128xf32>
    %47 = tpu.matmul %42, %46, %cst_20 {dimension_numbers = #tpu.dot_dimension_numbers<[1], [0], [0], [1], [0, 0, 1, 1], [], []>} : vector<8x8xbf16>, vector<8x128xbf16>, vector<8x128xf32> -> vector<8x128xf32>
    %48 = arith.addf %45, %47 : vector<8x128xf32>
    %49 = vector.broadcast %4 : vector<1x128xf32> to vector<8x128xf32>
    %50 = arith.addf %48, %49 : vector<8x128xf32>
    %cst_21 = arith.constant 0.000000e+00 : f32
    %51 = vector.broadcast %cst_21 : f32 to vector<8x128xf32>
    %52 = arith.maximumf %50, %51 : vector<8x128xf32>
    %cst_22 = arith.constant dense<0.000000e+00> : vector<8xf32>
    %53 = vector.multi_reduction <add>, %52, %cst_22 [1] : vector<8x128xf32> to vector<8xf32>
    %54 = vector.shape_cast %53 : vector<8xf32> to vector<8x1xf32>
    %cst_23 = arith.constant 0.010416667 : f32
    %55 = vector.broadcast %cst_23 : f32 to vector<8x1xf32>
    %56 = arith.mulf %54, %55 : vector<8x1xf32>
    %57 = vector.broadcast %56 : vector<8x1xf32> to vector<8x128xf32>
    %58 = arith.subf %52, %57 : vector<8x128xf32>
    %59 = arith.mulf %58, %58 : vector<8x128xf32>
    %cst_24 = arith.constant dense<0.000000e+00> : vector<8xf32>
    %60 = vector.multi_reduction <add>, %59, %cst_24 [1] : vector<8x128xf32> to vector<8xf32>
    %61 = vector.shape_cast %60 : vector<8xf32> to vector<8x1xf32>
    %62 = arith.mulf %56, %56 : vector<8x1xf32>
    %cst_25 = arith.constant 3.200000e+01 : f32
    %63 = vector.broadcast %cst_25 : f32 to vector<8x1xf32>
    %64 = arith.mulf %63, %62 : vector<8x1xf32>
    %65 = arith.subf %61, %64 : vector<8x1xf32>
    %cst_26 = arith.constant 0.010416667 : f32
    %66 = vector.broadcast %cst_26 : f32 to vector<8x1xf32>
    %67 = arith.mulf %65, %66 : vector<8x1xf32>
    %cst_27 = arith.constant 0.000000e+00 : f32
    %68 = vector.broadcast %cst_27 : f32 to vector<8x1xf32>
    %69 = arith.maximumf %67, %68 : vector<8x1xf32>
    %cst_28 = arith.constant 9.99999974E-6 : f32
    %70 = vector.broadcast %cst_28 : f32 to vector<8x1xf32>
    %71 = arith.addf %69, %70 : vector<8x1xf32>
    %72 = math.rsqrt %71 : vector<8x1xf32>
    %73 = vector.broadcast %72 : vector<8x1xf32> to vector<8x128xf32>
    %74 = arith.mulf %58, %73 : vector<8x128xf32>
    %75 = vector.broadcast %5 : vector<1x128xf32> to vector<8x128xf32>
    %76 = arith.mulf %74, %75 : vector<8x128xf32>
    %77 = vector.broadcast %6 : vector<1x128xf32> to vector<8x128xf32>
    %78 = arith.addf %76, %77 : vector<8x128xf32>
    %79 = arith.truncf %0 : vector<8x128xf32> to vector<8x128xbf16>
    %80 = arith.truncf %78 : vector<8x128xf32> to vector<8x128xbf16>
    %cst_29 = arith.constant dense<0.000000e+00> : vector<8x8xf32>
    %81 = tpu.matmul %79, %80, %cst_29 {dimension_numbers = #tpu.dot_dimension_numbers<[1], [1], [0], [0], [0, 0, 1, 0], [], []>} : vector<8x128xbf16>, vector<8x128xbf16>, vector<8x8xf32> -> vector<8x8xf32>
    %82 = vector.extract_strided_slice %81 {offsets = [6, 0], sizes = [1, 8], strides = [1, 1]} : vector<8x8xf32> to vector<1x8xf32>
    %c0_30 = arith.constant 0 : index
    %83 = memref.load %arg7[%c0_30] : memref<1xf32, #tpu.memory_space<smem>>
    %84 = vector.broadcast %83 : f32 to vector<1x8xf32>
    %85 = arith.addf %82, %84 : vector<1x8xf32>
    %c0_31 = arith.constant 0 : index
    %c0_32 = arith.constant 0 : index
    %86 = vector.load %arg8[%c0_31, %c0_32] : memref<1x8xf32, #tpu.memory_space<vmem>>, vector<1x8xf32>
    tpu.vector_store %arg8[%c0_31, %c0_32], %85 {strides = array<i32>} : memref<1x8xf32, #tpu.memory_space<vmem>>, vector<1x8xf32>,
    return
  }
  func.func @transform_0(%arg0: i32) -> (i32, i32) {
    %c0_i32 = arith.constant 0 : i32
    %c0_i32_0 = arith.constant 0 : i32
    return %arg0, %c0_i32 : i32, i32
  }
  func.func @transform_1(%arg0: i32) -> (i32, i32) {
    %c0_i32 = arith.constant 0 : i32
    %c0_i32_0 = arith.constant 0 : i32
    return %arg0, %c0_i32 : i32, i32
  }
  func.func @transform_2(%arg0: i32) -> (i32, i32) {
    %c0_i32 = arith.constant 0 : i32
    %c0_i32_0 = arith.constant 0 : i32
    %c0_i32_1 = arith.constant 0 : i32
    return %c0_i32, %c0_i32_0 : i32, i32
  }
  func.func @transform_3(%arg0: i32) -> (i32, i32) {
    %c0_i32 = arith.constant 0 : i32
    %c0_i32_0 = arith.constant 0 : i32
    %c0_i32_1 = arith.constant 0 : i32
    return %c0_i32, %c0_i32_0 : i32, i32
  }
  func.func @transform_4(%arg0: i32) -> (i32, i32) {
    %c0_i32 = arith.constant 0 : i32
    %c0_i32_0 = arith.constant 0 : i32
    %c0_i32_1 = arith.constant 0 : i32
    return %c0_i32, %c0_i32_0 : i32, i32
  }
  func.func @transform_5(%arg0: i32) -> (i32, i32) {
    %c0_i32 = arith.constant 0 : i32
    %c0_i32_0 = arith.constant 0 : i32
    %c0_i32_1 = arith.constant 0 : i32
    return %c0_i32, %c0_i32_0 : i32, i32
  }
  func.func @transform_6(%arg0: i32) -> i32 {
    %c0_i32 = arith.constant 0 : i32
    %c0_i32_0 = arith.constant 0 : i32
    return %c0_i32 : i32
  }
  func.func @transform_7(%arg0: i32) -> (i32, i32) {
    %c0_i32 = arith.constant 0 : i32
    %c0_i32_0 = arith.constant 0 : i32
    return %c0_i32, %arg0 : i32, i32
  }
}

</mosaic_0001>

<llo_original>
// kernel: tpu_custom_call.1
$region0: #{tpu_custom_call.1}
  #allocation0 [shape = 'u32[]', space=smem, size = 0x4, offset = 0x4, fixed_abs, tag = 'smem constant byte address 0x4 - core index']
  #allocation1 [shape = 'u32[144,128]{1,0:T(1,128)}', space=vmem, size = 0x12000, scoped, tag = 'internal scratch']
  #allocation2 [shape = 'f32[1]{0:T(128)S(6)}', space=smem, size = 0x200, scoped, tag = 'scoped memory for tpu_custom_call.1']
  %s0 = inlined_call_operand.hbm [shape: f32[8,16], index: 0, kind: input, shape index: {}]
  %s1 = inlined_call_operand.hbm [shape: f32[8,8], index: 1, kind: input, shape index: {}]
  %s2 = inlined_call_operand.hbm [shape: bf16[16,128], index: 2, kind: input, shape index: {}]
  %s3 = inlined_call_operand.hbm [shape: bf16[128,128], index: 3, kind: input, shape index: {}]
  %s4 = inlined_call_operand.hbm [shape: bf16[8,128], index: 4, kind: input, shape index: {}]
  %s5 = inlined_call_operand.vmem [shape: f32[8,128], index: 5, kind: input, shape index: {}]
  %s6 = inlined_call_operand.<no memory space> [shape: f32[1], index: 6, kind: input, shape index: {}]
  %s7 = inlined_call_operand.hbm [shape: f32[1,8], index: 7, kind: output, shape index: {}]
  %s8 = sld [smem:[#allocation0]]
  $region58: #{tpu_custom_call.1} parent=0
    _
  %s10 = ssub.s32 1, %s8
  %s11 = scalar_select 0, %s10, %s8
  %12 = sst [smem:[#allocation2]] %s6
  $region1: #{tpu_custom_call.1} parent=0
    #allocation3 [shape = 'u8[4096]{0}', space=vmem, size = 0x1000, scoped, tag = 'input window, operand 0, single buffered']
    #allocation4 [shape = 's32[1]{0}', space=sflag, size = 0x4, scoped, tag = 'scoped memory for tpu_custom_call.1']
    #allocation5 [shape = 's32[1]{0}', space=sflag, size = 0x4, scoped, tag = 'scoped memory for tpu_custom_call.1']
    #allocation6 [shape = 'u8[4096]{0}', space=vmem, size = 0x1000, scoped, tag = 'input window, operand 1, single buffered']
    #allocation7 [shape = 's32[1]{0}', space=sflag, size = 0x4, scoped, tag = 'scoped memory for tpu_custom_call.1']
    #allocation8 [shape = 'u8[4096]{0}', space=vmem, size = 0x1000, scoped, tag = 'input window, operand 2, single buffered']
    #allocation9 [shape = 'u8[32768]{0}', space=vmem, size = 0x8000, scoped, tag = 'input window, operand 3, single buffered']
    #allocation10 [shape = 's32[1]{0}', space=sflag, size = 0x4, scoped, tag = 'scoped memory for tpu_custom_call.1']
    #allocation11 [shape = 'u8[2048]{0}', space=vmem, size = 0x800, scoped, tag = 'input window, operand 4, single buffered']
    #allocation12 [shape = 'u8[512]{0}', space=vmem, size = 0x400, scoped, tag = 'output window, operand 0, single buffered']
    %13 = vsyncpa [#allocation4], 0
    %14 = vsyncpa [#allocation7], 0
    %15 = vsyncpa [#allocation10], 0
    %16 = vsyncpa [#allocation5], 0
    // Predicated region
    $region2: #{tpu_custom_call.1} parent=1 // pred_check
      _
    $region3: #{tpu_custom_call.1} parent=1 // pred_check_branch
      %18 = sbr.rel (0) target = $region5
    $region4: #{tpu_custom_call.1} parent=1 // pred_region
      %s20 = ssub.s32 128, 128
      %21 = vsyncadd [#allocation4], %s20
      %s23 = sshll.u32 [#allocation3], 4
      %s24 = int_to_ptr.vmem [resolvable:$true] %s23
      %26 = dma.hbm_to_vmem [thread:$0]  %s0, 128, %s24, [#allocation4]
    $region5: #{tpu_custom_call.1} parent=1 // pred_fallthru
      _
    // Predicated region
    $region6: #{tpu_custom_call.1} parent=1 // pred_check
      _
    $region7: #{tpu_custom_call.1} parent=1 // pred_check_branch
      %28 = sbr.rel (0) target = $region9
    $region8: #{tpu_custom_call.1} parent=1 // pred_region
      %s30 = ssub.s32 128, 128
      %31 = vsyncadd [#allocation7], %s30
      %s33 = sshll.u32 [#allocation6], 4
      %s34 = int_to_ptr.vmem [resolvable:$true] %s33
      %36 = dma.hbm_to_vmem [thread:$0]  %s1, 128, %s34, [#allocation7]
    $region9: #{tpu_custom_call.1} parent=1 // pred_fallthru
      _
    // Predicated region
    $region10: #{tpu_custom_call.1} parent=1 // pred_check
      _
    $region11: #{tpu_custom_call.1} parent=1 // pred_check_branch
      %38 = sbr.rel (0) target = $region13
    $region12: #{tpu_custom_call.1} parent=1 // pred_region
      %s40 = ssub.s32 128, 128
      %41 = vsyncadd [#allocation7], %s40
      %s42 = sshll.u32 [#allocation8], 4
      %s43 = int_to_ptr.vmem [resolvable:$true] %s42
      %48 = dma.hbm_to_vmem [thread:$0]  %s2, 128, %s43, [#allocation7], 64, 64, 4
    $region13: #{tpu_custom_call.1} parent=1 // pred_fallthru
      _
    // Predicated region
    $region14: #{tpu_custom_call.1} parent=1 // pred_check
      _
    $region15: #{tpu_custom_call.1} parent=1 // pred_check_branch
      %50 = sbr.rel (0) target = $region17
    $region16: #{tpu_custom_call.1} parent=1 // pred_region
      %s52 = ssub.s32 1024, 1024
      %53 = vsyncadd [#allocation10], %s52
      %s54 = sshll.u32 [#allocation9], 4
      %s55 = int_to_ptr.vmem [resolvable:$true] %s54
      %60 = dma.hbm_to_vmem [thread:$0]  %s3, 1024, %s55, [#allocation10], 64, 64, 4
    $region17: #{tpu_custom_call.1} parent=1 // pred_fallthru
      _
    // Predicated region
    $region18: #{tpu_custom_call.1} parent=1 // pred_check
      _
    $region19: #{tpu_custom_call.1} parent=1 // pred_check_branch
      %62 = sbr.rel (0) target = $region21
    $region20: #{tpu_custom_call.1} parent=1 // pred_region
      %s64 = ssub.s32 64, 64
      %65 = vsyncadd [#allocation10], %s64
      %s67 = sshll.u32 [#allocation11], 4
      %s68 = int_to_ptr.vmem [resolvable:$true] %s67
      %70 = dma.hbm_to_vmem [thread:$0]  %s4, 64, %s68, [#allocation10]
    $region21: #{tpu_custom_call.1} parent=1 // pred_fallthru
      _
    // Predicated region
    $region22: #{tpu_custom_call.1} parent=1 // pred_check
      _
    $region23: #{tpu_custom_call.1} parent=1 // pred_check_branch
      %72 = sbr.rel (0) target = $region25
    $region24: #{tpu_custom_call.1} parent=1 // pred_region
      _
    $region25: #{tpu_custom_call.1} parent=1 // pred_fallthru
      _
    // Predicated region
    $region26: #{tpu_custom_call.1} parent=1 // pred_check
      _
    $region27: #{tpu_custom_call.1} parent=1 // pred_check_branch
      %74 = sbr.rel (0) target = $region29
    $region28: #{tpu_custom_call.1} parent=1 // pred_region
      _
    $region29: #{tpu_custom_call.1} parent=1 // pred_fallthru
      _
    // Predicated region
    $region30: #{tpu_custom_call.1} parent=1 // pred_check
      _
    $region31: #{tpu_custom_call.1} parent=1 // pred_check_branch
      %76 = sbr.rel (0) target = $region33
    $region32: #{tpu_custom_call.1} parent=1 // pred_region
      %77 = dma.done [#allocation4], 128
    $region33: #{tpu_custom_call.1} parent=1 // pred_fallthru
      _
    // Predicated region
    $region34: #{tpu_custom_call.1} parent=1 // pred_check
      _
    $region35: #{tpu_custom_call.1} parent=1 // pred_check_branch
      %79 = sbr.rel (0) target = $region37
    $region36: #{tpu_custom_call.1} parent=1 // pred_region
      %80 = dma.done [#allocation7], 128
    $region37: #{tpu_custom_call.1} parent=1 // pred_fallthru
      _
    // Predicated region
    $region38: #{tpu_custom_call.1} parent=1 // pred_check
      _
    $region39: #{tpu_custom_call.1} parent=1 // pred_check_branch
      %82 = sbr.rel (0) target = $region41
    $region40: #{tpu_custom_call.1} parent=1 // pred_region
      %83 = dma.done [#allocation7], 128
    $region41: #{tpu_custom_call.1} parent=1 // pred_fallthru
      _
    // Predicated region
    $region42: #{tpu_custom_call.1} parent=1 // pred_check
      _
    $region43: #{tpu_custom_call.1} parent=1 // pred_check_branch
      %85 = sbr.rel (0) target = $region45
    $region44: #{tpu_custom_call.1} parent=1 // pred_region
      %86 = dma.done [#allocation10], 1024
    $region45: #{tpu_custom_call.1} parent=1 // pred_fallthru
      _
    // Predicated region
    $region46: #{tpu_custom_call.1} parent=1 // pred_check
      _
    $region47: #{tpu_custom_call.1} parent=1 // pred_check_branch
      %88 = sbr.rel (0) target = $region49
    $region48: #{tpu_custom_call.1} parent=1 // pred_region
      %89 = dma.done [#allocation10], 64
    $region49: #{tpu_custom_call.1} parent=1 // pred_fallthru
      _
    %v91 = vld [vmem:[%s5] sm:$0xff]
    %v92 = vld [vmem:[#allocation3] sm:$0xff]
    %v93 = vpack.c.bf16 %v92, %v92
    %v94 = vld [vmem:[#allocation8] sm:$0xf]
    %v95 = vld [vmem:[#allocation8 + $0x4] sm:$0xf]
    %v96 = vlaneseq
    %v97 = vshrl.u32 %v96, 7
    %v98 = vsub.s32 0, %v97
    %v99 = vrot.slane %v91, %v98
    %v102 = vunpack.c.l.b16 %v94
    %v103 = vunpack.c.l.b16 %v95
    %v104 = vpack.c.b16 %v103, %v102
    %vm106 = vcmask 130048
    %v108 = vsel %vm106, %v93, 0
    %110 = vmatprep.subr.bf16.mxu0 0
    %111 = vmatpush1.bf16.msra.mxu0 0
    %112 = vmatprep.subr.bf16.mxu0 0
    %113 = vmatpush1.bf16.msra.mxu0 0
    %114 = vmatprep.subr.bf16.mxu0 0
    %115 = vmatpush1.bf16.msra.mxu0 0
    %116 = vmatprep.subr.bf16.mxu0 0
    %117 = vmatpush1.bf16.msra.mxu0 0
    %118 = vmatprep.subr.bf16.mxu0 0
    %119 = vmatpush1.bf16.msra.mxu0 0
    %120 = vmatprep.subr.bf16.mxu0 0
    %121 = vmatpush1.bf16.msra.mxu0 0
    %122 = vmatprep.subr.bf16.mxu0 0
    %123 = vmatpush1.bf16.msra.mxu0 0
    %124 = vmatprep.subr.bf16.mxu0 0
    %125 = vmatpush1.bf16.msra.mxu0 %v104
    %126 = vmatprep.subr.bf16.mxu0 0
    %127 = vmatpush2.bf16.msra.mxu0 0
    %128 = vmatprep.subr.bf16.mxu0 0
    %129 = vmatpush2.bf16.msra.mxu0 0
    %130 = vmatprep.subr.bf16.mxu0 0
    %131 = vmatpush2.bf16.msra.mxu0 0
    %132 = vmatprep.subr.bf16.mxu0 0
    %133 = vmatpush2.bf16.msra.mxu0 0
    %134 = vmatprep.subr.bf16.mxu0 0
    %135 = vmatpush2.bf16.msra.mxu0 0
    %136 = vmatprep.subr.bf16.mxu0 0
    %137 = vmatpush2.bf16.msra.mxu0 0
    %138 = vmatprep.subr.bf16.mxu0 0
    %139 = vmatpush2.bf16.msra.mxu0 0
    %140 = vmatprep.subr.bf16.mxu0 0
    %141 = vmatpush2.bf16.msra.mxu0 0
    %142 = vmatprep.mubr.bf16.mxu0 0
    %143 = vmatmul.mubr.bf16.gmra.mxu0 %v108
    %v144 = vpop.f32.mrf.mxu0
    %v145 = vadd.f32 %v99, %v144
    %v146 = vpop.f32.mrf.mxu0
    %v147 = vpop.f32.mrf.mxu0
    %v148 = vpop.f32.mrf.mxu0
    %149 = vdwg.mxu0
    %v150 = vmax.f32 %v145, 0.0
    %151 = vadd.xlane.f32.xlu0 %v150
    %v152 = vpop.xlane.xlu0 %151
    %v153 = vmul.f32 %v152, 0.008333334
    %v154 = vsub.f32 %v150, %v153
    %v155 = vmul.f32 %v154, %v154
    %156 = vadd.xlane.f32.xlu0 %v155
    %v157 = vpop.xlane.xlu0 %156
    %v158 = vmul.f32 %v153, %v153
    %v159 = vmul.f32 %v158, 8.0
    %v160 = vsub.f32 %v157, %v159
    %v161 = vmul.f32 %v160, 0.008333334
    %v162 = vmax.f32 %v161, 0.0
    %v163 = vadd.f32 %v162, 1e-05
    %v164 = vrsqrt.pop %v163
    %v165 = vmul.f32 %v154, %v164
    %v166 = vlaneseq
    %v167 = vshrl.u32 %v166, 7
    %v168 = vsub.s32 1, %v167
    %v169 = vrot.slane %v91, %v168
    %v170 = vmul.f32 %v165, %v169
    %v171 = vlaneseq
    %v172 = vshrl.u32 %v171, 7
    %v173 = vsub.s32 2, %v172
    %v174 = vrot.slane %v91, %v173
    %v175 = vadd.f32 %v170, %v174
    %v176 = vld [vmem:[#allocation6] sm:$0xff]
    %v177 = vpack.c.bf16 %v176, %v176
    %v178 = vpack.c.bf16 %v175, %v175
    %v179 = vld [vmem:[#allocation9] sm:$0xf]
    %v180 = vld [vmem:[#allocation9 + $0x4] sm:$0xf]
    %v181 = vld [vmem:[#allocation9 + $0x8] sm:$0xf]
    %v182 = vld [vmem:[#allocation9 + $0xc] sm:$0xf]
    %v183 = vld [vmem:[#allocation9 + $0x10] sm:$0xf]
    %v184 = vld [vmem:[#allocation9 + $0x14] sm:$0xf]
    %v185 = vld [vmem:[#allocation9 + $0x18] sm:$0xf]
    %v186 = vld [vmem:[#allocation9 + $0x1c] sm:$0xf]
    %v187 = vld [vmem:[#allocation9 + $0x20] sm:$0xf]
    %v188 = vld [vmem:[#allocation9 + $0x24] sm:$0xf]
    %v189 = vld [vmem:[#allocation9 + $0x28] sm:$0xf]
    %v190 = vld [vmem:[#allocation9 + $0x2c] sm:$0xf]
    %v191 = vld [vmem:[#allocation9 + $0x30] sm:$0xf]
    %v192 = vld [vmem:[#allocation9 + $0x34] sm:$0xf]
    %v193 = vld [vmem:[#allocation9 + $0x38] sm:$0xf]
    %v194 = vld [vmem:[#allocation9 + $0x3c] sm:$0xf]
    %v195 = vld [vmem:[#allocation11] sm:$0xf]
    %vm196 = vcmask 64512
    %v198 = vsel %vm196, %v177, 0
    %vm200 = vcmask 1043456
    %v202 = vsel %vm200, %v195, 0
    %204 = vmatprep.subr.bf16.mxu0 0
    %205 = vmatpush1.bf16.msra.mxu0 0
    %206 = vmatprep.subr.bf16.mxu0 0
    %207 = vmatpush1.bf16.msra.mxu0 0
    %208 = vmatprep.subr.bf16.mxu0 0
    %209 = vmatpush1.bf16.msra.mxu0 0
    %210 = vmatprep.subr.bf16.mxu0 0
    %211 = vmatpush1.bf16.msra.mxu0 0
    %212 = vmatprep.subr.bf16.mxu0 0
    %213 = vmatpush1.bf16.msra.mxu0 0
    %214 = vmatprep.subr.bf16.mxu0 0
    %215 = vmatpush1.bf16.msra.mxu0 0
    %216 = vmatprep.subr.bf16.mxu0 0
    %217 = vmatpush1.bf16.msra.mxu0 0
    %218 = vmatprep.subr.bf16.mxu0 0
    %219 = vmatpush1.bf16.msra.mxu0 %v202
    %220 = vmatprep.subr.bf16.mxu0 0
    %221 = vmatpush2.bf16.msra.mxu0 0
    %222 = vmatprep.subr.bf16.mxu0 0
    %223 = vmatpush2.bf16.msra.mxu0 0
    %224 = vmatprep.subr.bf16.mxu0 0
    %225 = vmatpush2.bf16.msra.mxu0 0
    %226 = vmatprep.subr.bf16.mxu0 0
    %227 = vmatpush2.bf16.msra.mxu0 0
    %228 = vmatprep.subr.bf16.mxu0 0
    %229 = vmatpush2.bf16.msra.mxu0 0
    %230 = vmatprep.subr.bf16.mxu0 0
    %231 = vmatpush2.bf16.msra.mxu0 0
    %232 = vmatprep.subr.bf16.mxu0 0
    %233 = vmatpush2.bf16.msra.mxu0 0
    %234 = vmatprep.subr.bf16.mxu0 0
    %235 = vmatpush2.bf16.msra.mxu0 0
    %236 = vmatprep.mubr.bf16.mxu0 0
    %237 = vmatmul.mubr.bf16.gmra.mxu0 %v198
    %v238 = vpop.f32.mrf.mxu0
    %v239 = vadd.f32 0.0, %v238
    %v240 = vpop.f32.mrf.mxu0
    %v241 = vpop.f32.mrf.mxu0
    %v242 = vpop.f32.mrf.mxu0
    %243 = vdwg.mxu0
    %v260 = vunpack.c.l.b16 %v179
    %v261 = vunpack.c.l.b16 %v180
    %v262 = vunpack.c.l.b16 %v181
    %v263 = vunpack.c.l.b16 %v182
    %v264 = vunpack.c.l.b16 %v183
    %v265 = vunpack.c.l.b16 %v184
    %v266 = vunpack.c.l.b16 %v185
    %v267 = vunpack.c.l.b16 %v186
    %v268 = vunpack.c.l.b16 %v187
    %v269 = vunpack.c.l.b16 %v188
    %v270 = vunpack.c.l.b16 %v189
    %v271 = vunpack.c.l.b16 %v190
    %v272 = vunpack.c.l.b16 %v191
    %v273 = vunpack.c.l.b16 %v192
    %v274 = vunpack.c.l.b16 %v193
    %v275 = vunpack.c.l.b16 %v194
    %v276 = vpack.c.b16 %v261, %v260
    %v277 = vpack.c.b16 %v263, %v262
    %v278 = vpack.c.b16 %v265, %v264
    %v279 = vpack.c.b16 %v267, %v266
    %v280 = vpack.c.b16 %v269, %v268
    %v281 = vpack.c.b16 %v271, %v270
    %v282 = vpack.c.b16 %v273, %v272
    %v283 = vpack.c.b16 %v275, %v274
    %292 = vmatprep.subr.bf16.mxu0 0
    %293 = vmatpush1.bf16.msra.mxu0 %v283
    %294 = vmatprep.subr.bf16.mxu0 0
    %295 = vmatpush1.bf16.msra.mxu0 %v282
    %296 = vmatprep.subr.bf16.mxu0 0
    %297 = vmatpush1.bf16.msra.mxu0 %v281
    %298 = vmatprep.subr.bf16.mxu0 0
    %299 = vmatpush1.bf16.msra.mxu0 %v280
    %300 = vmatprep.subr.bf16.mxu0 0
    %301 = vmatpush1.bf16.msra.mxu0 %v279
    %302 = vmatprep.subr.bf16.mxu0 0
    %303 = vmatpush1.bf16.msra.mxu0 %v278
    %304 = vmatprep.subr.bf16.mxu0 0
    %305 = vmatpush1.bf16.msra.mxu0 %v277
    %306 = vmatprep.subr.bf16.mxu0 0
    %307 = vmatpush1.bf16.msra.mxu0 %v276
    %308 = vmatprep.subr.bf16.mxu0 0
    %309 = vmatpush2.bf16.msra.mxu0 0
    %310 = vmatprep.subr.bf16.mxu0 0
    %311 = vmatpush2.bf16.msra.mxu0 0
    %312 = vmatprep.subr.bf16.mxu0 0
    %313 = vmatpush2.bf16.msra.mxu0 0
    %314 = vmatprep.subr.bf16.mxu0 0
    %315 = vmatpush2.bf16.msra.mxu0 0
    %316 = vmatprep.subr.bf16.mxu0 0
    %317 = vmatpush2.bf16.msra.mxu0 0
    %318 = vmatprep.subr.bf16.mxu0 0
    %319 = vmatpush2.bf16.msra.mxu0 0
    %320 = vmatprep.subr.bf16.mxu0 0
    %321 = vmatpush2.bf16.msra.mxu0 0
    %322 = vmatprep.subr.bf16.mxu0 0
    %323 = vmatpush2.bf16.msra.mxu0 0
    %324 = vmatprep.mubr.bf16.mxu0 0
    %325 = vmatmul.mubr.bf16.gmra.mxu0 %v178
    %v326 = vpop.f32.mrf.mxu0
    %v327 = vadd.f32 %v239, %v326
    %v328 = vpop.f32.mrf.mxu0
    %v329 = vpop.f32.mrf.mxu0
    %v330 = vpop.f32.mrf.mxu0
    %331 = vdwg.mxu0
    %v332 = vlaneseq
    %v333 = vshrl.u32 %v332, 7
    %v334 = vsub.s32 3, %v333
    %v335 = vrot.slane %v91, %v334
    %v336 = vadd.f32 %v327, %v335
    %v337 = vmax.f32 %v336, 0.0
    %338 = vadd.xlane.f32.xlu0 %v337
    %v339 = vpop.xlane.xlu0 %338
    %v340 = vmul.f32 %v339, 0.010416667
    %v341 = vsub.f32 %v337, %v340
    %v342 = vmul.f32 %v341, %v341
    %343 = vadd.xlane.f32.xlu0 %v342
    %v344 = vpop.xlane.xlu0 %343
    %v345 = vmul.f32 %v340, %v340
    %v346 = vmul.f32 %v345, 32.0
    %v347 = vsub.f32 %v344, %v346
    %v348 = vmul.f32 %v347, 0.010416667
    %v349 = vmax.f32 %v348, 0.0
    %v350 = vadd.f32 %v349, 1e-05
    %v351 = vrsqrt.pop %v350
    %v352 = vmul.f32 %v341, %v351
    %v353 = vlaneseq
    %v354 = vshrl.u32 %v353, 7
    %v355 = vsub.s32 4, %v354
    %v356 = vrot.slane %v91, %v355
    %v357 = vmul.f32 %v352, %v356
    %v358 = vlaneseq
    %v359 = vshrl.u32 %v358, 7
    %v360 = vsub.s32 5, %v359
    %v361 = vrot.slane %v91, %v360
    %v362 = vadd.f32 %v357, %v361
    %v363 = vpack.c.bf16 %v91, %v91
    %v364 = vpack.c.bf16 %v362, %v362
    %365 = vmatprep.subr.bf16.mxu0 0
    %366 = vmatpush1.bf16.xpose.msra.mxu0 0
    %367 = vmatprep.subr.bf16.mxu0 0
    %368 = vmatpush1.bf16.xpose.msra.mxu0 0
    %369 = vmatprep.subr.bf16.mxu0 0
    %370 = vmatpush1.bf16.xpose.msra.mxu0 0
    %371 = vmatprep.subr.bf16.mxu0 0
    %372 = vmatpush1.bf16.xpose.msra.mxu0 0
    %373 = vmatprep.subr.bf16.mxu0 0
    %374 = vmatpush1.bf16.xpose.msra.mxu0 0
    %375 = vmatprep.subr.bf16.mxu0 0
    %376 = vmatpush1.bf16.xpose.msra.mxu0 0
    %377 = vmatprep.subr.bf16.mxu0 0
    %378 = vmatpush1.bf16.xpose.msra.mxu0 0
    %379 = vmatprep.subr.bf16.mxu0 0
    %380 = vmatpush1.bf16.xpose.msra.mxu0 %v364
    %381 = vmatprep.subr.bf16.mxu0 0
    %382 = vmatpush2.bf16.xpose.msra.mxu0 0
    %383 = vmatprep.subr.bf16.mxu0 0
    %384 = vmatpush2.bf16.xpose.msra.mxu0 0
    %385 = vmatprep.subr.bf16.mxu0 0
    %386 = vmatpush2.bf16.xpose.msra.mxu0 0
    %387 = vmatprep.subr.bf16.mxu0 0
    %388 = vmatpush2.bf16.xpose.msra.mxu0 0
    %389 = vmatprep.subr.bf16.mxu0 0
    %390 = vmatpush2.bf16.xpose.msra.mxu0 0
    %391 = vmatprep.subr.bf16.mxu0 0
    %392 = vmatpush2.bf16.xpose.msra.mxu0 0
    %393 = vmatprep.subr.bf16.mxu0 0
    %394 = vmatpush2.bf16.xpose.msra.mxu0 0
    %395 = vmatprep.subr.bf16.mxu0 0
    %396 = vmatpush2.bf16.xpose.msra.mxu0 0
    %397 = vmatprep.mubr.bf16.mxu0 0
    %398 = vmatmul.mubr.bf16.gmra.mxu0 %v363
    %v399 = vpop.f32.mrf.mxu0
    %v400 = vadd.f32 0.0, %v399
    %v401 = vpop.f32.mrf.mxu0
    %v402 = vpop.f32.mrf.mxu0
    %v403 = vpop.f32.mrf.mxu0
    %404 = vdwg.mxu0
    %s405 = sld [smem:[#allocation2]]
    %v406 = vstv %s405
    %v407 = vadd.f32 %v400, %v406
    %vm408 = vcmask 63494
    %409 = vst.msk [vmem:[#allocation12 - $0x6] sm:$0x40] %vm408, %v407
    // Predicated region
    $region50: #{tpu_custom_call.1} parent=1 // pred_check
      _
    $region51: #{tpu_custom_call.1} parent=1 // pred_check_branch
      %411 = sbr.rel (0) target = $region53
    $region52: #{tpu_custom_call.1} parent=1 // pred_region
      %s413 = ssub.s32 16, 16
      %414 = vsyncadd [#allocation5], %s413
      %s416 = sshll.u32 [#allocation12], 4
      %s417 = int_to_ptr.vmem [resolvable:$true] %s416
      %419 = dma.vmem_to_hbm [thread:$0]  %s417, 16, %s7, [#allocation5]
    $region53: #{tpu_custom_call.1} parent=1 // pred_fallthru
      _
    // Predicated region
    $region54: #{tpu_custom_call.1} parent=1 // pred_check
      _
    $region55: #{tpu_custom_call.1} parent=1 // pred_check_branch
      %421 = sbr.rel (0) target = $region57
    $region56: #{tpu_custom_call.1} parent=1 // pred_region
      %422 = dma.done [#allocation5], 16
    $region57: #{tpu_custom_call.1} parent=1 // pred_fallthru
      _
    %423 = vsyncpa [#allocation4], 1
    %424 = vsyncpa [#allocation7], 1
    %425 = vsyncpa [#allocation10], 1
    %426 = vsyncpa [#allocation5], 1

</llo_original>
